<compile_context>
chip_gen: v7x
topology: tpu7x:2x2x1
jax: 0.10.0
libtpu: 0.0.40
codegen_flags: <defaults>
</compile_context>

<pallas_src>
import jax
import jax.numpy as jnp
from jax.experimental import pallas as pl
from jax.experimental.pallas import tpu as pltpu


def _pf_kernel(bias_ref, sp2_ref, loc_ref, sc_ref, out_ref):
    """One row-tile: reduce D (lane axis) for tm rows, emit lane-dense (2, tm).

    out_ref[0, :] = sum_d loc[:, d] + bias
    out_ref[1, :] = sqrt(sum_d scale[:, d]^2 + softplus(scale_param)^2) + 1e-5
    """
    bias = bias_ref[0]
    sp2 = sp2_ref[0]

    # Inputs stay in their native dtype in HBM/VMEM; cast per-tile (VPU slack),
    # all reductions accumulate in f32.
    x = loc_ref[...].astype(jnp.float32)            # (tm, D)
    s = sc_ref[...].astype(jnp.float32)             # (tm, D)
    d = x.shape[-1]

    # Lane-dense reduction on the (idle) MXU: contracting the LAST dim of both
    # operands gives output (1, tm) with the per-row sums along lanes, so the
    # (2, tm) output block is written with full, unmasked 128-lane stores.
    # HIGHEST precision keeps the f32 sums exact (no bf16 single-pass rounding).
    ones_row = jnp.ones((1, d), jnp.float32)
    dn = (((1,), (1,)), ((), ()))                   # contract d with d, no batch
    loc_row = jax.lax.dot_general(
        ones_row, x, dn,
        precision=jax.lax.Precision.HIGHEST,
        preferred_element_type=jnp.float32)          # (1, tm)
    sq_row = jax.lax.dot_general(
        ones_row, s * s, dn,
        precision=jax.lax.Precision.HIGHEST,
        preferred_element_type=jnp.float32)          # (1, tm)

    out_ref[0:1, :] = loc_row + bias
    out_ref[1:2, :] = jnp.sqrt(sq_row + sp2) + 1e-05


def _choose_tm(m, d, itemsize):
    """Row-tile size.

    ~1 MiB of input per array per block (amortizes ~0.35us/step even at v7x's
    ~3.2 TB/s HBM), multiple of 128 rows so the lane-dense (2, tm) output block
    is legal when multi-block, and split into >= 2 blocks for moderate M so the
    grid can shard across v7x's two TensorCores.
    """
    budget_rows = (1 << 20) // max(1, d * itemsize)
    tm = min(8192, max(128, budget_rows))
    tm = (tm // 128) * 128
    if m > tm:
        return tm
    # Whole problem fits in one block.
    if m > 256:
        # Still split into >= 2 blocks so both v7x TensorCores get work.
        half = (((m + 1) // 2) + 127) // 128 * 128
        if half < m:
            return half
    return m


def p_f_forward(q_phi_x_loc, q_phi_x_scale, bias, scale_param):
    """Pallas TPU forward for P_f_."""
    assert q_phi_x_loc.shape == q_phi_x_scale.shape
    lead_shape = q_phi_x_loc.shape[:-1]
    D = q_phi_x_loc.shape[-1]
    M = 1
    for sdim in lead_shape:
        M *= sdim

    # Flatten leading dims only -- NO dtype cast here (that would be an extra
    # full HBM pass); the cast happens per-tile inside the kernel.
    loc2d = q_phi_x_loc.reshape(M, D)
    sc2d = q_phi_x_scale.reshape(M, D)
    itemsize = jnp.dtype(loc2d.dtype).itemsize

    # Hoisted scalar prep: numerically stable softplus (logaddexp), squared.
    bias_f = bias.astype(jnp.float32).reshape(1)
    sp = jnp.logaddexp(0.0, scale_param.astype(jnp.float32).reshape(1))
    sp2 = sp * sp                                               # (1,)

    tm = _choose_tm(M, D, itemsize)
    grid = (pl.cdiv(M, tm),)

    # 2 inputs x 2 pipeline buffers + in-kernel f32 temporaries + tiny output
    # blocks; only override the scoped-VMEM default (16 MiB v5e / 32 MiB
    # v6e/v7x) when a very large D would exceed it.
    vmem_est = 2 * 2 * tm * D * itemsize + 3 * tm * D * 4 + 4 * 2 * tm * 4
    params = {"dimension_semantics": ("parallel",)}
    if vmem_est > (12 << 20):
        params["vmem_limit_bytes"] = int(min(vmem_est + (8 << 20), 64 << 20))

    out = pl.pallas_call(
        _pf_kernel,
        out_shape=jax.ShapeDtypeStruct((2, M), jnp.float32),
        grid_spec=pltpu.PrefetchScalarGridSpec(
            num_scalar_prefetch=0,
            grid=grid,
            in_specs=[
                pl.BlockSpec(memory_space=pltpu.SMEM),        # bias (1,)
                pl.BlockSpec(memory_space=pltpu.SMEM),        # softplus(scale)^2 (1,)
                pl.BlockSpec((tm, D), lambda i: (i, 0)),      # loc rows (native dtype)
                pl.BlockSpec((tm, D), lambda i: (i, 0)),      # scale rows (native dtype)
            ],
            out_specs=pl.BlockSpec((2, tm), lambda i: (0, i)),
        ),
        compiler_params=pltpu.CompilerParams(**params),
    )(bias_f, sp2, loc2d, sc2d)

    out_loc = out[0].reshape(lead_shape)
    out_scale = out[1].reshape(lead_shape)

    # torch .squeeze(-1): only squeezes if the last remaining dim is size 1.
    if len(lead_shape) > 0 and lead_shape[-1] == 1:
        out_loc = jnp.squeeze(out_loc, axis=-1)
        out_scale = jnp.squeeze(out_scale, axis=-1)
    return out_loc, out_scale


def _reference(q_loc, q_scale, bias, scale_param):
    sp = jnp.logaddexp(0.0, scale_param[0])
    loc = jnp.sum(q_loc.astype(jnp.float32), axis=-1) + bias[0]
    scale = jnp.sqrt(jnp.sum(q_scale.astype(jnp.float32) ** 2, axis=-1) + sp ** 2) + 1e-05
    if loc.ndim > 0 and loc.shape[-1] == 1:
        loc = jnp.squeeze(loc, axis=-1)
        scale = jnp.squeeze(scale, axis=-1)
    return loc, scale


if __name__ == "__main__":
    key = jax.random.PRNGKey(0)
    k1, k2, k3, k4 = jax.random.split(key, 4)

    # Small shapes consistent with the module: batch=2, seq=8, hidden=32.
    B, N, D = 2, 8, 32
    q_phi_x_loc = jax.random.normal(k1, (B, N, D), dtype=jnp.float32)
    q_phi_x_scale = jnp.abs(jax.random.normal(k2, (B, N, D), dtype=jnp.float32))

    # Deterministic parameter init (module has torch.randn(1) for each).
    bias = jax.random.normal(k3, (1,), dtype=jnp.float32)
    scale_param = jax.random.normal(k4, (1,), dtype=jnp.float32)

    fwd = jax.jit(p_f_forward)
    loc, scale = fwd(q_phi_x_loc, q_phi_x_scale, bias, scale_param)
    loc = jax.block_until_ready(loc)
    scale = jax.block_until_ready(scale)

    ref_loc, ref_scale = _reference(q_phi_x_loc, q_phi_x_scale, bias, scale_param)
    assert loc.shape == ref_loc.shape and scale.shape == ref_scale.shape
    assert jnp.allclose(loc, ref_loc, atol=2e-5, rtol=2e-5)
    assert jnp.allclose(scale, ref_scale, atol=2e-5, rtol=2e-5)

    # Second check exercising the multi-block / ragged-last-block path
    # (bf16 inputs also exercise the in-kernel cast path).
    k5, k6 = jax.random.split(k1)
    B2, N2 = 5, 123
    x2 = jax.random.normal(k5, (B2, N2, D), dtype=jnp.bfloat16)
    s2 = jnp.abs(jax.random.normal(k6, (B2, N2, D), dtype=jnp.bfloat16))
    loc2, scale2 = jax.jit(p_f_forward)(x2, s2, bias, scale_param)
    loc2 = jax.block_until_ready(loc2)
    scale2 = jax.block_until_ready(scale2)
    ref_loc2, ref_scale2 = _reference(x2, s2, bias, scale_param)
    assert loc2.shape == ref_loc2.shape and scale2.shape == ref_scale2.shape
    assert jnp.allclose(loc2, ref_loc2, atol=1e-4, rtol=1e-4)
    assert jnp.allclose(scale2, ref_scale2, atol=1e-4, rtol=1e-4)

    print("KERNEL_OK")
</pallas_src>

<mosaic_0001>
module attributes {stable_mosaic.version = 11 : i64} {
  func.func @_pf_kernel(%arg0: i32, %arg1: memref<1xf32, #tpu.memory_space<smem>>, %arg2: memref<1xf32, #tpu.memory_space<smem>>, %arg3: memref<16x32xf32, #tpu.memory_space<vmem>>, %arg4: memref<16x32xf32, #tpu.memory_space<vmem>>, %arg5: memref<2x16xf32, #tpu.memory_space<vmem>>) attributes {dimension_semantics = [#tpu.dimension_semantics<parallel>], iteration_bounds = array<i64: 1>, scalar_prefetch = 0 : i64, scratch_operands = 0 : i64, tpu.core_type = #tpu.core_type<tc>, window_params = [{transform_indices = @transform_0, window_bounds = array<i64: 1>}, {transform_indices = @transform_1, window_bounds = array<i64: 1>}, {transform_indices = @transform_2, window_bounds = array<i64: 16, 32>}, {transform_indices = @transform_3, window_bounds = array<i64: 16, 32>}, {transform_indices = @transform_4, window_bounds = array<i64: 2, 16>}]} {
    %c0 = arith.constant 0 : index
    %0 = memref.load %arg1[%c0] : memref<1xf32, #tpu.memory_space<smem>>
    %c0_0 = arith.constant 0 : index
    %1 = memref.load %arg2[%c0_0] : memref<1xf32, #tpu.memory_space<smem>>
    %c0_1 = arith.constant 0 : index
    %c0_2 = arith.constant 0 : index
    %2 = vector.load %arg3[%c0_1, %c0_2] : memref<16x32xf32, #tpu.memory_space<vmem>>, vector<16x32xf32>
    %c0_3 = arith.constant 0 : index
    %c0_4 = arith.constant 0 : index
    %3 = vector.load %arg4[%c0_3, %c0_4] : memref<16x32xf32, #tpu.memory_space<vmem>>, vector<16x32xf32>
    %cst = arith.constant 1.000000e+00 : f32
    %4 = vector.broadcast %cst : f32 to vector<1x32xf32>
    %cst_5 = arith.constant dense<0.000000e+00> : vector<1x16xf32>
    %5 = tpu.matmul %4, %2, %cst_5 {dimension_numbers = #tpu.dot_dimension_numbers<[1], [1], [0], [0], [0, 0, 1, 0], [], []>, precision = #tpu.contract_precision<fp32>} : vector<1x32xf32>, vector<16x32xf32>, vector<1x16xf32> -> vector<1x16xf32>
    %6 = arith.mulf %3, %3 : vector<16x32xf32>
    %cst_6 = arith.constant dense<0.000000e+00> : vector<1x16xf32>
    %7 = tpu.matmul %4, %6, %cst_6 {dimension_numbers = #tpu.dot_dimension_numbers<[1], [1], [0], [0], [0, 0, 1, 0], [], []>, precision = #tpu.contract_precision<fp32>} : vector<1x32xf32>, vector<16x32xf32>, vector<1x16xf32> -> vector<1x16xf32>
    %8 = vector.broadcast %0 : f32 to vector<1x16xf32>
    %9 = arith.addf %5, %8 : vector<1x16xf32>
    %c0_7 = arith.constant 0 : index
    %c0_8 = arith.constant 0 : index
    %10 = vector.load %arg5[%c0_7, %c0_8] : memref<2x16xf32, #tpu.memory_space<vmem>>, vector<1x16xf32>
    tpu.vector_store %arg5[%c0_7, %c0_8], %9 {strides = array<i32>} : memref<2x16xf32, #tpu.memory_space<vmem>>, vector<1x16xf32>,
    %11 = vector.broadcast %1 : f32 to vector<1x16xf32>
    %12 = arith.addf %7, %11 : vector<1x16xf32>
    %13 = math.sqrt %12 : vector<1x16xf32>
    %cst_9 = arith.constant 9.99999974E-6 : f32
    %14 = vector.broadcast %cst_9 : f32 to vector<1x16xf32>
    %15 = arith.addf %13, %14 : vector<1x16xf32>
    %c1 = arith.constant 1 : index
    %c0_10 = arith.constant 0 : index
    %16 = vector.load %arg5[%c1, %c0_10] : memref<2x16xf32, #tpu.memory_space<vmem>>, vector<1x16xf32>
    tpu.vector_store %arg5[%c1, %c0_10], %15 {strides = array<i32>} : memref<2x16xf32, #tpu.memory_space<vmem>>, vector<1x16xf32>,
    return
  }
  func.func @transform_0(%arg0: i32) -> i32 {
    %c0_i32 = arith.constant 0 : i32
    %c0_i32_0 = arith.constant 0 : i32
    return %c0_i32 : i32
  }
  func.func @transform_1(%arg0: i32) -> i32 {
    %c0_i32 = arith.constant 0 : i32
    %c0_i32_0 = arith.constant 0 : i32
    return %c0_i32 : i32
  }
  func.func @transform_2(%arg0: i32) -> (i32, i32) {
    %c0_i32 = arith.constant 0 : i32
    %c0_i32_0 = arith.constant 0 : i32
    return %arg0, %c0_i32 : i32, i32
  }
  func.func @transform_3(%arg0: i32) -> (i32, i32) {
    %c0_i32 = arith.constant 0 : i32
    %c0_i32_0 = arith.constant 0 : i32
    return %arg0, %c0_i32 : i32, i32
  }
  func.func @transform_4(%arg0: i32) -> (i32, i32) {
    %c0_i32 = arith.constant 0 : i32
    %c0_i32_0 = arith.constant 0 : i32
    return %c0_i32, %arg0 : i32, i32
  }
}

</mosaic_0001>

<llo_original>
// kernel: squeeze.3
$region0: #{squeeze.3}
  %s0 = inlined_call_operand.vmem [shape: f32[16], index: 0, kind: input, shape index: {}]
  %s1 = inlined_call_operand.hbm [shape: f32[2,8], index: 1, kind: output, shape index: {}]
  $region1: #{squeeze.3} parent=0
    #allocation0 [shape = 'u8[1024]{0}', space=vmem, size = 0x400, scoped, tag = 'operand span for operand 1']
    #allocation1 [shape = 's32[1]{0}', space=sflag, size = 0x4, scoped, tag = 'scoped memory for squeeze.3']
    #allocation2 [shape = 'u8[4096]{0}', space=vmem, size = 0x1000, scoped, tag = 'scoped mem for output reshape']
    #allocation3 [shape = 'u8[4096]{0}', space=vmem, size = 0x1000, scoped, tag = 'scoped mem for input reshape']
    %2 = vsyncpa [#allocation1], 0
    %s4 = sshllo.u32 0, 1
    %v5 = vld [vmem:[%s0] sm:%s4]
    %6 = vst [vmem:[#allocation3] sm:%s4] %v5
    %v7 = vld [vmem:[#allocation3] sm:$0x1]
    %vm8 = vcmask 64512
    %9 = vst.msk [vmem:[#allocation2] sm:$0x1] %vm8, %v7
    %v10 = vld [vmem:[#allocation3] sm:$0x1]
    %11 = vrot.lane.b32.xlu0 %v10, 120
    %v12 = vpop.permute.xlu0 %11
    %vm13 = vcmask 64512
    %s14 = scalar_lea.vmem [#allocation2], 1
    %15 = vst.msk [vmem:[%s14] sm:$0x1] %vm13, %v12
    %s17 = sshllo.u32 0, 2
    %v19 = vld [vmem:[#allocation2] sm:%s17]
    %s20 = sshllo.u32 0, 2
    %21 = vst [vmem:[#allocation0] sm:%s20] %v19
    %s23 = ssub.s32 32, 32
    %24 = vsyncadd [#allocation1], %s23
    %s26 = sshll.u32 [#allocation0], 4
    %s27 = int_to_ptr.vmem [resolvable:$true] %s26
    %29 = dma.vmem_to_hbm [thread:$0]  %s27, 32, %s1, [#allocation1]
    %30 = dma.done [#allocation1], 32
    %31 = vsyncpa [#allocation1], 1

// kernel: p_f_forward.1
$region0: #{p_f_forward.1}
  #allocation0 [shape = 'u32[]', space=smem, size = 0x4, offset = 0x4, fixed_abs, tag = 'smem constant byte address 0x4 - core index']
  #allocation1 [shape = 'u32[144,128]{1,0:T(1,128)}', space=vmem, size = 0x12000, scoped, tag = 'internal scratch']
  #allocation2 [shape = 'f32[1]{0:T(128)S(6)}', space=smem, size = 0x200, scoped, tag = 'scoped memory for p_f_forward.1']
  #allocation3 [shape = 'f32[1]{0:T(128)S(6)}', space=smem, size = 0x200, scoped, tag = 'scoped memory for p_f_forward.1']
  %s0 = inlined_call_operand.<no memory space> [shape: f32[1], index: 0, kind: input, shape index: {}]
  %s1 = inlined_call_operand.<no memory space> [shape: f32[1], index: 1, kind: input, shape index: {}]
  %s2 = inlined_call_operand.vmem [shape: f32[16,32], index: 2, kind: input, shape index: {}]
  %s3 = inlined_call_operand.vmem [shape: f32[16,32], index: 3, kind: input, shape index: {}]
  %s4 = inlined_call_operand.vmem [shape: f32[2,16], index: 4, kind: output, shape index: {}]
  %s5 = sld [smem:[#allocation0]]
  $region26: #{p_f_forward.1} parent=0
    _
  %s7 = ssub.s32 1, %s5
  %s8 = scalar_select 0, %s7, %s5
  %9 = sst [smem:[#allocation2]] %s0
  %10 = sst [smem:[#allocation3]] %s1
  // Predicated region
  $region2: #{p_f_forward.1} parent=0 // pred_check
    _
  $region3: #{p_f_forward.1} parent=0 // pred_check_branch
    %12 = sbr.rel (0) target = $region5
  $region4: #{p_f_forward.1} parent=0 // pred_region
    _
  $region5: #{p_f_forward.1} parent=0 // pred_fallthru
    _
  // Predicated region
  $region6: #{p_f_forward.1} parent=0 // pred_check
    _
  $region7: #{p_f_forward.1} parent=0 // pred_check_branch
    %14 = sbr.rel (0) target = $region9
  $region8: #{p_f_forward.1} parent=0 // pred_region
    _
  $region9: #{p_f_forward.1} parent=0 // pred_fallthru
    _
  // Predicated region
  $region10: #{p_f_forward.1} parent=0 // pred_check
    _
  $region11: #{p_f_forward.1} parent=0 // pred_check_branch
    %16 = sbr.rel (0) target = $region13
  $region12: #{p_f_forward.1} parent=0 // pred_region
    _
  $region13: #{p_f_forward.1} parent=0 // pred_fallthru
    _
  // Predicated region
  $region14: #{p_f_forward.1} parent=0 // pred_check
    _
  $region15: #{p_f_forward.1} parent=0 // pred_check_branch
    %18 = sbr.rel (0) target = $region17
  $region16: #{p_f_forward.1} parent=0 // pred_region
    _
  $region17: #{p_f_forward.1} parent=0 // pred_fallthru
    _
  %s19 = sld [smem:[#allocation2]]
  %s20 = sld [smem:[#allocation3]]
  %v21 = vld [vmem:[%s2] sm:$0xff]
  %v22 = vld [vmem:[%s2 + $0x8] sm:$0xff]
  %v23 = vld [vmem:[%s3] sm:$0xff]
  %v24 = vld [vmem:[%s3 + $0x8] sm:$0xff]
  %v25 = vmul.f32 %v23, %v23
  %v26 = vmul.f32 %v24, %v24
  %v27 = vstv %s19
  %vm28 = vcmask 261120
  %v30 = vsel %vm28, 1.0, 0
  %v33 = vsel %vm28, %v21, 0
  %v36 = vsel %vm28, %v22, 0
  %38 = vmatprep.subr.mxu0 0.0
  %v39 = vand.u32 %v33, 4294901760
  %40 = vmatpush1.xpose.msra.mxu0 %v39
  %41 = vmatprep.subr.mxu0 0.0
  %v42 = vand.u32 %v36, 4294901760
  %43 = vmatpush1.xpose.msra.mxu0 %v42
  %44 = vmatprep.subr.mxu0 0.0
  %45 = vmatpush1.xpose.msra.mxu0 0.0
  %46 = vmatprep.subr.mxu0 0.0
  %47 = vmatpush1.xpose.msra.mxu0 0.0
  %48 = vmatprep.subr.mxu0 0.0
  %49 = vmatpush1.xpose.msra.mxu0 0.0
  %50 = vmatprep.subr.mxu0 0.0
  %51 = vmatpush1.xpose.msra.mxu0 0.0
  %52 = vmatprep.subr.mxu0 0.0
  %53 = vmatpush1.xpose.msra.mxu0 0.0
  %54 = vmatprep.subr.mxu0 0.0
  %55 = vmatpush1.xpose.msra.mxu0 0.0
  %56 = vmatprep.subr.mxu0 0.0
  %57 = vmatpush1.xpose.msra.mxu0 0.0
  %58 = vmatprep.subr.mxu0 0.0
  %59 = vmatpush1.xpose.msra.mxu0 0.0
  %60 = vmatprep.subr.mxu0 0.0
  %61 = vmatpush1.xpose.msra.mxu0 0.0
  %62 = vmatprep.subr.mxu0 0.0
  %63 = vmatpush1.xpose.msra.mxu0 0.0
  %64 = vmatprep.subr.mxu0 0.0
  %65 = vmatpush1.xpose.msra.mxu0 0.0
  %66 = vmatprep.subr.mxu0 0.0
  %67 = vmatpush1.xpose.msra.mxu0 0.0
  %68 = vmatprep.subr.mxu0 0.0
  %69 = vmatpush1.xpose.msra.mxu0 0.0
  %70 = vmatprep.subr.mxu0 0.0
  %71 = vmatpush1.xpose.msra.mxu0 0.0
  %72 = vmatprep.subr.mxu0 0.0
  %73 = vmatpush1.xpose.msra.mxu0 0.0
  %74 = vmatprep.subr.mxu0 0.0
  %75 = vmatpush1.xpose.msra.mxu0 0.0
  %76 = vmatprep.subr.mxu0 0.0
  %77 = vmatpush1.xpose.msra.mxu0 0.0
  %78 = vmatprep.subr.mxu0 0.0
  %79 = vmatpush1.xpose.msra.mxu0 0.0
  %80 = vmatprep.subr.mxu0 0.0
  %81 = vmatpush1.xpose.msra.mxu0 0.0
  %82 = vmatprep.subr.mxu0 0.0
  %83 = vmatpush1.xpose.msra.mxu0 0.0
  %84 = vmatprep.subr.mxu0 0.0
  %85 = vmatpush1.xpose.msra.mxu0 0.0
  %86 = vmatprep.subr.mxu0 0.0
  %87 = vmatpush1.xpose.msra.mxu0 0.0
  %88 = vmatprep.subr.mxu0 0.0
  %89 = vmatpush1.xpose.msra.mxu0 0.0
  %90 = vmatprep.subr.mxu0 0.0
  %91 = vmatpush1.xpose.msra.mxu0 0.0
  %92 = vmatprep.subr.mxu0 0.0
  %93 = vmatpush1.xpose.msra.mxu0 0.0
  %94 = vmatprep.subr.mxu0 0.0
  %95 = vmatpush1.xpose.msra.mxu0 0.0
  %96 = vmatprep.subr.mxu0 0.0
  %97 = vmatpush1.xpose.msra.mxu0 0.0
  %98 = vmatprep.subr.mxu0 0.0
  %99 = vmatpush1.xpose.msra.mxu0 0.0
  %100 = vmatprep.subr.mxu0 0.0
  %101 = vmatpush1.xpose.msra.mxu0 0.0
  %102 = vmatprep.subr.mxu0 0.0
  %103 = vmatpush1.xpose.msra.mxu0 0.0
  %104 = vmatprep.mubr.f32.mxu0 0.0
  %v105 = vand.u32 %v30, 4294901760
  %v106 = vsub.f32 %v30, %v105
  %v107 = vand.u32 %v106, 4294901760
  %v108 = vsub.f32 %v106, %v107
  %v109 = vand.u32 %v108, 4294901760
  %110 = vmatmul.mubr.f32.gmra.mrb[0].mxu0 %v109
  %v111 = vpop.f32.mrb[0].mxu0
  %v112 = vadd.f32 %v27, %v111
  %v113 = vpop.f32.mrb[0].mxu0
  %114 = vdwg.mxu0
  %115 = vmatprep.subr.mxu0 0.0
  %v116 = vand.u32 %v33, 4294901760
  %v117 = vsub.f32 %v33, %v116
  %v118 = vand.u32 %v117, 4294901760
  %v119 = vsub.f32 %v117, %v118
  %v120 = vand.u32 %v119, 4294901760
  %121 = vmatpush1.xpose.msra.mxu0 %v120
  %122 = vmatprep.subr.mxu0 0.0
  %v123 = vand.u32 %v36, 4294901760
  %v124 = vsub.f32 %v36, %v123
  %v125 = vand.u32 %v124, 4294901760
  %v126 = vsub.f32 %v124, %v125
  %v127 = vand.u32 %v126, 4294901760
  %128 = vmatpush1.xpose.msra.mxu0 %v127
  %129 = vmatprep.subr.mxu0 0.0
  %130 = vmatpush1.xpose.msra.mxu0 0.0
  %131 = vmatprep.subr.mxu0 0.0
  %132 = vmatpush1.xpose.msra.mxu0 0.0
  %133 = vmatprep.subr.mxu0 0.0
  %134 = vmatpush1.xpose.msra.mxu0 0.0
  %135 = vmatprep.subr.mxu0 0.0
  %136 = vmatpush1.xpose.msra.mxu0 0.0
  %137 = vmatprep.subr.mxu0 0.0
  %138 = vmatpush1.xpose.msra.mxu0 0.0
  %139 = vmatprep.subr.mxu0 0.0
  %140 = vmatpush1.xpose.msra.mxu0 0.0
  %141 = vmatprep.subr.mxu0 0.0
  %142 = vmatpush1.xpose.msra.mxu0 0.0
  %143 = vmatprep.subr.mxu0 0.0
  %144 = vmatpush1.xpose.msra.mxu0 0.0
  %145 = vmatprep.subr.mxu0 0.0
  %146 = vmatpush1.xpose.msra.mxu0 0.0
  %147 = vmatprep.subr.mxu0 0.0
  %148 = vmatpush1.xpose.msra.mxu0 0.0
  %149 = vmatprep.subr.mxu0 0.0
  %150 = vmatpush1.xpose.msra.mxu0 0.0
  %151 = vmatprep.subr.mxu0 0.0
  %152 = vmatpush1.xpose.msra.mxu0 0.0
  %153 = vmatprep.subr.mxu0 0.0
  %154 = vmatpush1.xpose.msra.mxu0 0.0
  %155 = vmatprep.subr.mxu0 0.0
  %156 = vmatpush1.xpose.msra.mxu0 0.0
  %157 = vmatprep.subr.mxu0 0.0
  %158 = vmatpush1.xpose.msra.mxu0 0.0
  %159 = vmatprep.subr.mxu0 0.0
  %160 = vmatpush1.xpose.msra.mxu0 0.0
  %161 = vmatprep.subr.mxu0 0.0
  %162 = vmatpush1.xpose.msra.mxu0 0.0
  %163 = vmatprep.subr.mxu0 0.0
  %164 = vmatpush1.xpose.msra.mxu0 0.0
  %165 = vmatprep.subr.mxu0 0.0
  %166 = vmatpush1.xpose.msra.mxu0 0.0
  %167 = vmatprep.subr.mxu0 0.0
  %168 = vmatpush1.xpose.msra.mxu0 0.0
  %169 = vmatprep.subr.mxu0 0.0
  %170 = vmatpush1.xpose.msra.mxu0 0.0
  %171 = vmatprep.subr.mxu0 0.0
  %172 = vmatpush1.xpose.msra.mxu0 0.0
  %173 = vmatprep.subr.mxu0 0.0
  %174 = vmatpush1.xpose.msra.mxu0 0.0
  %175 = vmatprep.subr.mxu0 0.0
  %176 = vmatpush1.xpose.msra.mxu0 0.0
  %177 = vmatprep.subr.mxu0 0.0
  %178 = vmatpush1.xpose.msra.mxu0 0.0
  %179 = vmatprep.subr.mxu0 0.0
  %180 = vmatpush1.xpose.msra.mxu0 0.0
  %181 = vmatprep.subr.mxu0 0.0
  %182 = vmatpush1.xpose.msra.mxu0 0.0
  %183 = vmatprep.subr.mxu0 0.0
  %184 = vmatpush1.xpose.msra.mxu0 0.0
  %185 = vmatprep.subr.mxu0 0.0
  %186 = vmatpush1.xpose.msra.mxu0 0.0
  %187 = vmatprep.subr.mxu0 0.0
  %188 = vmatpush1.xpose.msra.mxu0 0.0
  %189 = vmatprep.mubr.f32.mxu0 0.0
  %v190 = vand.u32 %v30, 4294901760
  %191 = vmatmul.mubr.f32.gmra.mrb[0].mxu0 %v190
  %v192 = vpop.f32.mrb[0].mxu0
  %v193 = vadd.f32 %v112, %v192
  %v194 = vpop.f32.mrb[0].mxu0
  %195 = vdwg.mxu0
  %196 = vmatprep.subr.mxu0 0.0
  %v197 = vand.u32 %v33, 4294901760
  %v198 = vsub.f32 %v33, %v197
  %199 = vmatpush1.xpose.msra.mxu0 %v198
  %200 = vmatprep.subr.mxu0 0.0
  %v201 = vand.u32 %v36, 4294901760
  %v202 = vsub.f32 %v36, %v201
  %203 = vmatpush1.xpose.msra.mxu0 %v202
  %204 = vmatprep.subr.mxu0 0.0
  %205 = vmatpush1.xpose.msra.mxu0 0.0
  %206 = vmatprep.subr.mxu0 0.0
  %207 = vmatpush1.xpose.msra.mxu0 0.0
  %208 = vmatprep.subr.mxu0 0.0
  %209 = vmatpush1.xpose.msra.mxu0 0.0
  %210 = vmatprep.subr.mxu0 0.0
  %211 = vmatpush1.xpose.msra.mxu0 0.0
  %212 = vmatprep.subr.mxu0 0.0
  %213 = vmatpush1.xpose.msra.mxu0 0.0
  %214 = vmatprep.subr.mxu0 0.0
  %215 = vmatpush1.xpose.msra.mxu0 0.0
  %216 = vmatprep.subr.mxu0 0.0
  %217 = vmatpush1.xpose.msra.mxu0 0.0
  %218 = vmatprep.subr.mxu0 0.0
  %219 = vmatpush1.xpose.msra.mxu0 0.0
  %220 = vmatprep.subr.mxu0 0.0
  %221 = vmatpush1.xpose.msra.mxu0 0.0
  %222 = vmatprep.subr.mxu0 0.0
  %223 = vmatpush1.xpose.msra.mxu0 0.0
  %224 = vmatprep.subr.mxu0 0.0
  %225 = vmatpush1.xpose.msra.mxu0 0.0
  %226 = vmatprep.subr.mxu0 0.0
  %227 = vmatpush1.xpose.msra.mxu0 0.0
  %228 = vmatprep.subr.mxu0 0.0
  %229 = vmatpush1.xpose.msra.mxu0 0.0
  %230 = vmatprep.subr.mxu0 0.0
  %231 = vmatpush1.xpose.msra.mxu0 0.0
  %232 = vmatprep.subr.mxu0 0.0
  %233 = vmatpush1.xpose.msra.mxu0 0.0
  %234 = vmatprep.subr.mxu0 0.0
  %235 = vmatpush1.xpose.msra.mxu0 0.0
  %236 = vmatprep.subr.mxu0 0.0
  %237 = vmatpush1.xpose.msra.mxu0 0.0
  %238 = vmatprep.subr.mxu0 0.0
  %239 = vmatpush1.xpose.msra.mxu0 0.0
  %240 = vmatprep.subr.mxu0 0.0
  %241 = vmatpush1.xpose.msra.mxu0 0.0
  %242 = vmatprep.subr.mxu0 0.0
  %243 = vmatpush1.xpose.msra.mxu0 0.0
  %244 = vmatprep.subr.mxu0 0.0
  %245 = vmatpush1.xpose.msra.mxu0 0.0
  %246 = vmatprep.subr.mxu0 0.0
  %247 = vmatpush1.xpose.msra.mxu0 0.0
  %248 = vmatprep.subr.mxu0 0.0
  %249 = vmatpush1.xpose.msra.mxu0 0.0
  %250 = vmatprep.subr.mxu0 0.0
  %251 = vmatpush1.xpose.msra.mxu0 0.0
  %252 = vmatprep.subr.mxu0 0.0
  %253 = vmatpush1.xpose.msra.mxu0 0.0
  %254 = vmatprep.subr.mxu0 0.0
  %255 = vmatpush1.xpose.msra.mxu0 0.0
  %256 = vmatprep.subr.mxu0 0.0
  %257 = vmatpush1.xpose.msra.mxu0 0.0
  %258 = vmatprep.subr.mxu0 0.0
  %259 = vmatpush1.xpose.msra.mxu0 0.0
  %260 = vmatprep.subr.mxu0 0.0
  %261 = vmatpush1.xpose.msra.mxu0 0.0
  %262 = vmatprep.subr.mxu0 0.0
  %263 = vmatpush1.xpose.msra.mxu0 0.0
  %264 = vmatprep.mubr.f32.mxu0 0.0
  %v265 = vand.u32 %v30, 4294901760
  %v266 = vsub.f32 %v30, %v265
  %267 = vmatmul.mubr.f32.gmra.mrb[0].mxu0 %v266
  %v268 = vpop.f32.mrb[0].mxu0
  %v269 = vadd.f32 %v193, %v268
  %v270 = vpop.f32.mrb[0].mxu0
  %271 = vdwg.mxu0
  %272 = vmatprep.subr.mxu0 0.0
  %v273 = vand.u32 %v33, 4294901760
  %274 = vmatpush1.xpose.msra.mxu0 %v273
  %275 = vmatprep.subr.mxu0 0.0
  %v276 = vand.u32 %v36, 4294901760
  %277 = vmatpush1.xpose.msra.mxu0 %v276
  %278 = vmatprep.subr.mxu0 0.0
  %279 = vmatpush1.xpose.msra.mxu0 0.0
  %280 = vmatprep.subr.mxu0 0.0
  %281 = vmatpush1.xpose.msra.mxu0 0.0
  %282 = vmatprep.subr.mxu0 0.0
  %283 = vmatpush1.xpose.msra.mxu0 0.0
  %284 = vmatprep.subr.mxu0 0.0
  %285 = vmatpush1.xpose.msra.mxu0 0.0
  %286 = vmatprep.subr.mxu0 0.0
  %287 = vmatpush1.xpose.msra.mxu0 0.0
  %288 = vmatprep.subr.mxu0 0.0
  %289 = vmatpush1.xpose.msra.mxu0 0.0
  %290 = vmatprep.subr.mxu0 0.0
  %291 = vmatpush1.xpose.msra.mxu0 0.0
  %292 = vmatprep.subr.mxu0 0.0
  %293 = vmatpush1.xpose.msra.mxu0 0.0
  %294 = vmatprep.subr.mxu0 0.0
  %295 = vmatpush1.xpose.msra.mxu0 0.0
  %296 = vmatprep.subr.mxu0 0.0
  %297 = vmatpush1.xpose.msra.mxu0 0.0
  %298 = vmatprep.subr.mxu0 0.0
  %299 = vmatpush1.xpose.msra.mxu0 0.0
  %300 = vmatprep.subr.mxu0 0.0
  %301 = vmatpush1.xpose.msra.mxu0 0.0
  %302 = vmatprep.subr.mxu0 0.0
  %303 = vmatpush1.xpose.msra.mxu0 0.0
  %304 = vmatprep.subr.mxu0 0.0
  %305 = vmatpush1.xpose.msra.mxu0 0.0
  %306 = vmatprep.subr.mxu0 0.0
  %307 = vmatpush1.xpose.msra.mxu0 0.0
  %308 = vmatprep.subr.mxu0 0.0
  %309 = vmatpush1.xpose.msra.mxu0 0.0
  %310 = vmatprep.subr.mxu0 0.0
  %311 = vmatpush1.xpose.msra.mxu0 0.0
  %312 = vmatprep.subr.mxu0 0.0
  %313 = vmatpush1.xpose.msra.mxu0 0.0
  %314 = vmatprep.subr.mxu0 0.0
  %315 = vmatpush1.xpose.msra.mxu0 0.0
  %316 = vmatprep.subr.mxu0 0.0
  %317 = vmatpush1.xpose.msra.mxu0 0.0
  %318 = vmatprep.subr.mxu0 0.0
  %319 = vmatpush1.xpose.msra.mxu0 0.0
  %320 = vmatprep.subr.mxu0 0.0
  %321 = vmatpush1.xpose.msra.mxu0 0.0
  %322 = vmatprep.subr.mxu0 0.0
  %323 = vmatpush1.xpose.msra.mxu0 0.0
  %324 = vmatprep.subr.mxu0 0.0
  %325 = vmatpush1.xpose.msra.mxu0 0.0
  %326 = vmatprep.subr.mxu0 0.0
  %327 = vmatpush1.xpose.msra.mxu0 0.0
  %328 = vmatprep.subr.mxu0 0.0
  %329 = vmatpush1.xpose.msra.mxu0 0.0
  %330 = vmatprep.subr.mxu0 0.0
  %331 = vmatpush1.xpose.msra.mxu0 0.0
  %332 = vmatprep.subr.mxu0 0.0
  %333 = vmatpush1.xpose.msra.mxu0 0.0
  %334 = vmatprep.subr.mxu0 0.0
  %335 = vmatpush1.xpose.msra.mxu0 0.0
  %336 = vmatprep.subr.mxu0 0.0
  %337 = vmatpush1.xpose.msra.mxu0 0.0
  %338 = vmatprep.mubr.f32.mxu0 0.0
  %v339 = vand.u32 %v30, 4294901760
  %v340 = vsub.f32 %v30, %v339
  %v341 = vand.u32 %v340, 4294901760
  %342 = vmatmul.mubr.f32.gmra.mrb[0].mxu0 %v341
  %v343 = vpop.f32.mrb[0].mxu0
  %v344 = vadd.f32 %v269, %v343
  %v345 = vpop.f32.mrb[0].mxu0
  %346 = vdwg.mxu0
  %347 = vmatprep.subr.mxu0 0.0
  %v348 = vand.u32 %v33, 4294901760
  %v349 = vsub.f32 %v33, %v348
  %v350 = vand.u32 %v349, 4294901760
  %351 = vmatpush1.xpose.msra.mxu0 %v350
  %352 = vmatprep.subr.mxu0 0.0
  %v353 = vand.u32 %v36, 4294901760
  %v354 = vsub.f32 %v36, %v353
  %v355 = vand.u32 %v354, 4294901760
  %356 = vmatpush1.xpose.msra.mxu0 %v355
  %357 = vmatprep.subr.mxu0 0.0
  %358 = vmatpush1.xpose.msra.mxu0 0.0
  %359 = vmatprep.subr.mxu0 0.0
  %360 = vmatpush1.xpose.msra.mxu0 0.0
  %361 = vmatprep.subr.mxu0 0.0
  %362 = vmatpush1.xpose.msra.mxu0 0.0
  %363 = vmatprep.subr.mxu0 0.0
  %364 = vmatpush1.xpose.msra.mxu0 0.0
  %365 = vmatprep.subr.mxu0 0.0
  %366 = vmatpush1.xpose.msra.mxu0 0.0
  %367 = vmatprep.subr.mxu0 0.0
  %368 = vmatpush1.xpose.msra.mxu0 0.0
  %369 = vmatprep.subr.mxu0 0.0
  %370 = vmatpush1.xpose.msra.mxu0 0.0
  %371 = vmatprep.subr.mxu0 0.0
  %372 = vmatpush1.xpose.msra.mxu0 0.0
  %373 = vmatprep.subr.mxu0 0.0
  %374 = vmatpush1.xpose.msra.mxu0 0.0
  %375 = vmatprep.subr.mxu0 0.0
  %376 = vmatpush1.xpose.msra.mxu0 0.0
  %377 = vmatprep.subr.mxu0 0.0
  %378 = vmatpush1.xpose.msra.mxu0 0.0
  %379 = vmatprep.subr.mxu0 0.0
  %380 = vmatpush1.xpose.msra.mxu0 0.0
  %381 = vmatprep.subr.mxu0 0.0
  %382 = vmatpush1.xpose.msra.mxu0 0.0
  %383 = vmatprep.subr.mxu0 0.0
  %384 = vmatpush1.xpose.msra.mxu0 0.0
  %385 = vmatprep.subr.mxu0 0.0
  %386 = vmatpush1.xpose.msra.mxu0 0.0
  %387 = vmatprep.subr.mxu0 0.0
  %388 = vmatpush1.xpose.msra.mxu0 0.0
  %389 = vmatprep.subr.mxu0 0.0
  %390 = vmatpush1.xpose.msra.mxu0 0.0
  %391 = vmatprep.subr.mxu0 0.0
  %392 = vmatpush1.xpose.msra.mxu0 0.0
  %393 = vmatprep.subr.mxu0 0.0
  %394 = vmatpush1.xpose.msra.mxu0 0.0
  %395 = vmatprep.subr.mxu0 0.0
  %396 = vmatpush1.xpose.msra.mxu0 0.0
  %397 = vmatprep.subr.mxu0 0.0
  %398 = vmatpush1.xpose.msra.mxu0 0.0
  %399 = vmatprep.subr.mxu0 0.0
  %400 = vmatpush1.xpose.msra.mxu0 0.0
  %401 = vmatprep.subr.mxu0 0.0
  %402 = vmatpush1.xpose.msra.mxu0 0.0
  %403 = vmatprep.subr.mxu0 0.0
  %404 = vmatpush1.xpose.msra.mxu0 0.0
  %405 = vmatprep.subr.mxu0 0.0
  %406 = vmatpush1.xpose.msra.mxu0 0.0
  %407 = vmatprep.subr.mxu0 0.0
  %408 = vmatpush1.xpose.msra.mxu0 0.0
  %409 = vmatprep.subr.mxu0 0.0
  %410 = vmatpush1.xpose.msra.mxu0 0.0
  %411 = vmatprep.subr.mxu0 0.0
  %412 = vmatpush1.xpose.msra.mxu0 0.0
  %413 = vmatprep.subr.mxu0 0.0
  %414 = vmatpush1.xpose.msra.mxu0 0.0
  %415 = vmatprep.subr.mxu0 0.0
  %416 = vmatpush1.xpose.msra.mxu0 0.0
  %417 = vmatprep.mubr.f32.mxu0 0.0
  %v418 = vand.u32 %v30, 4294901760
  %419 = vmatmul.mubr.f32.gmra.mrb[0].mxu0 %v418
  %v420 = vpop.f32.mrb[0].mxu0
  %v421 = vadd.f32 %v344, %v420
  %v422 = vpop.f32.mrb[0].mxu0
  %423 = vdwg.mxu0
  %424 = vmatprep.subr.mxu0 0.0
  %v425 = vand.u32 %v33, 4294901760
  %426 = vmatpush1.xpose.msra.mxu0 %v425
  %427 = vmatprep.subr.mxu0 0.0
  %v428 = vand.u32 %v36, 4294901760
  %429 = vmatpush1.xpose.msra.mxu0 %v428
  %430 = vmatprep.subr.mxu0 0.0
  %431 = vmatpush1.xpose.msra.mxu0 0.0
  %432 = vmatprep.subr.mxu0 0.0
  %433 = vmatpush1.xpose.msra.mxu0 0.0
  %434 = vmatprep.subr.mxu0 0.0
  %435 = vmatpush1.xpose.msra.mxu0 0.0
  %436 = vmatprep.subr.mxu0 0.0
  %437 = vmatpush1.xpose.msra.mxu0 0.0
  %438 = vmatprep.subr.mxu0 0.0
  %439 = vmatpush1.xpose.msra.mxu0 0.0
  %440 = vmatprep.subr.mxu0 0.0
  %441 = vmatpush1.xpose.msra.mxu0 0.0
  %442 = vmatprep.subr.mxu0 0.0
  %443 = vmatpush1.xpose.msra.mxu0 0.0
  %444 = vmatprep.subr.mxu0 0.0
  %445 = vmatpush1.xpose.msra.mxu0 0.0
  %446 = vmatprep.subr.mxu0 0.0
  %447 = vmatpush1.xpose.msra.mxu0 0.0
  %448 = vmatprep.subr.mxu0 0.0
  %449 = vmatpush1.xpose.msra.mxu0 0.0
  %450 = vmatprep.subr.mxu0 0.0
  %451 = vmatpush1.xpose.msra.mxu0 0.0
  %452 = vmatprep.subr.mxu0 0.0
  %453 = vmatpush1.xpose.msra.mxu0 0.0
  %454 = vmatprep.subr.mxu0 0.0
  %455 = vmatpush1.xpose.msra.mxu0 0.0
  %456 = vmatprep.subr.mxu0 0.0
  %457 = vmatpush1.xpose.msra.mxu0 0.0
  %458 = vmatprep.subr.mxu0 0.0
  %459 = vmatpush1.xpose.msra.mxu0 0.0
  %460 = vmatprep.subr.mxu0 0.0
  %461 = vmatpush1.xpose.msra.mxu0 0.0
  %462 = vmatprep.subr.mxu0 0.0
  %463 = vmatpush1.xpose.msra.mxu0 0.0
  %464 = vmatprep.subr.mxu0 0.0
  %465 = vmatpush1.xpose.msra.mxu0 0.0
  %466 = vmatprep.subr.mxu0 0.0
  %467 = vmatpush1.xpose.msra.mxu0 0.0
  %468 = vmatprep.subr.mxu0 0.0
  %469 = vmatpush1.xpose.msra.mxu0 0.0
  %470 = vmatprep.subr.mxu0 0.0
  %471 = vmatpush1.xpose.msra.mxu0 0.0
  %472 = vmatprep.subr.mxu0 0.0
  %473 = vmatpush1.xpose.msra.mxu0 0.0
  %474 = vmatprep.subr.mxu0 0.0
  %475 = vmatpush1.xpose.msra.mxu0 0.0
  %476 = vmatprep.subr.mxu0 0.0
  %477 = vmatpush1.xpose.msra.mxu0 0.0
  %478 = vmatprep.subr.mxu0 0.0
  %479 = vmatpush1.xpose.msra.mxu0 0.0
  %480 = vmatprep.subr.mxu0 0.0
  %481 = vmatpush1.xpose.msra.mxu0 0.0
  %482 = vmatprep.subr.mxu0 0.0
  %483 = vmatpush1.xpose.msra.mxu0 0.0
  %484 = vmatprep.subr.mxu0 0.0
  %485 = vmatpush1.xpose.msra.mxu0 0.0
  %486 = vmatprep.subr.mxu0 0.0
  %487 = vmatpush1.xpose.msra.mxu0 0.0
  %488 = vmatprep.subr.mxu0 0.0
  %489 = vmatpush1.xpose.msra.mxu0 0.0
  %490 = vmatprep.mubr.f32.mxu0 0.0
  %v491 = vand.u32 %v30, 4294901760
  %492 = vmatmul.mubr.f32.gmra.mrb[0].mxu0 %v491
  %v493 = vpop.f32.mrb[0].mxu0
  %v494 = vadd.f32 %v421, %v493
  %v495 = vpop.f32.mrb[0].mxu0
  %496 = vdwg.mxu0
  %vm497 = vcmask 122880
  %498 = vst.msk [vmem:[%s4] sm:$0x1] %vm497, %v494
  %v499 = vstv %s20
  %v501 = vsel %vm28, %v25, 0
  %v504 = vsel %vm28, %v26, 0
  %506 = vmatprep.subr.mxu0 0.0
  %v507 = vand.u32 %v501, 4294901760
  %508 = vmatpush1.xpose.msra.mxu0 %v507
  %509 = vmatprep.subr.mxu0 0.0
  %v510 = vand.u32 %v504, 4294901760
  %511 = vmatpush1.xpose.msra.mxu0 %v510
  %512 = vmatprep.subr.mxu0 0.0
  %513 = vmatpush1.xpose.msra.mxu0 0.0
  %514 = vmatprep.subr.mxu0 0.0
  %515 = vmatpush1.xpose.msra.mxu0 0.0
  %516 = vmatprep.subr.mxu0 0.0
  %517 = vmatpush1.xpose.msra.mxu0 0.0
  %518 = vmatprep.subr.mxu0 0.0
  %519 = vmatpush1.xpose.msra.mxu0 0.0
  %520 = vmatprep.subr.mxu0 0.0
  %521 = vmatpush1.xpose.msra.mxu0 0.0
  %522 = vmatprep.subr.mxu0 0.0
  %523 = vmatpush1.xpose.msra.mxu0 0.0
  %524 = vmatprep.subr.mxu0 0.0
  %525 = vmatpush1.xpose.msra.mxu0 0.0
  %526 = vmatprep.subr.mxu0 0.0
  %527 = vmatpush1.xpose.msra.mxu0 0.0
  %528 = vmatprep.subr.mxu0 0.0
  %529 = vmatpush1.xpose.msra.mxu0 0.0
  %530 = vmatprep.subr.mxu0 0.0
  %531 = vmatpush1.xpose.msra.mxu0 0.0
  %532 = vmatprep.subr.mxu0 0.0
  %533 = vmatpush1.xpose.msra.mxu0 0.0
  %534 = vmatprep.subr.mxu0 0.0
  %535 = vmatpush1.xpose.msra.mxu0 0.0
  %536 = vmatprep.subr.mxu0 0.0
  %537 = vmatpush1.xpose.msra.mxu0 0.0
  %538 = vmatprep.subr.mxu0 0.0
  %539 = vmatpush1.xpose.msra.mxu0 0.0
  %540 = vmatprep.subr.mxu0 0.0
  %541 = vmatpush1.xpose.msra.mxu0 0.0
  %542 = vmatprep.subr.mxu0 0.0
  %543 = vmatpush1.xpose.msra.mxu0 0.0
  %544 = vmatprep.subr.mxu0 0.0
  %545 = vmatpush1.xpose.msra.mxu0 0.0
  %546 = vmatprep.subr.mxu0 0.0
  %547 = vmatpush1.xpose.msra.mxu0 0.0
  %548 = vmatprep.subr.mxu0 0.0
  %549 = vmatpush1.xpose.msra.mxu0 0.0
  %550 = vmatprep.subr.mxu0 0.0
  %551 = vmatpush1.xpose.msra.mxu0 0.0
  %552 = vmatprep.subr.mxu0 0.0
  %553 = vmatpush1.xpose.msra.mxu0 0.0
  %554 = vmatprep.subr.mxu0 0.0
  %555 = vmatpush1.xpose.msra.mxu0 0.0
  %556 = vmatprep.subr.mxu0 0.0
  %557 = vmatpush1.xpose.msra.mxu0 0.0
  %558 = vmatprep.subr.mxu0 0.0
  %559 = vmatpush1.xpose.msra.mxu0 0.0
  %560 = vmatprep.subr.mxu0 0.0
  %561 = vmatpush1.xpose.msra.mxu0 0.0
  %562 = vmatprep.subr.mxu0 0.0
  %563 = vmatpush1.xpose.msra.mxu0 0.0
  %564 = vmatprep.subr.mxu0 0.0
  %565 = vmatpush1.xpose.msra.mxu0 0.0
  %566 = vmatprep.subr.mxu0 0.0
  %567 = vmatpush1.xpose.msra.mxu0 0.0
  %568 = vmatprep.subr.mxu0 0.0
  %569 = vmatpush1.xpose.msra.mxu0 0.0
  %570 = vmatprep.subr.mxu0 0.0
  %571 = vmatpush1.xpose.msra.mxu0 0.0
  %572 = vmatprep.mubr.f32.mxu0 0.0
  %v573 = vand.u32 %v30, 4294901760
  %v574 = vsub.f32 %v30, %v573
  %v575 = vand.u32 %v574, 4294901760
  %v576 = vsub.f32 %v574, %v575
  %v577 = vand.u32 %v576, 4294901760
  %578 = vmatmul.mubr.f32.gmra.mrb[0].mxu0 %v577
  %v579 = vpop.f32.mrb[0].mxu0
  %v580 = vadd.f32 %v499, %v579
  %v581 = vpop.f32.mrb[0].mxu0
  %582 = vdwg.mxu0
  %583 = vmatprep.subr.mxu0 0.0
  %v584 = vand.u32 %v501, 4294901760
  %v585 = vsub.f32 %v501, %v584
  %v586 = vand.u32 %v585, 4294901760
  %v587 = vsub.f32 %v585, %v586
  %v588 = vand.u32 %v587, 4294901760
  %589 = vmatpush1.xpose.msra.mxu0 %v588
  %590 = vmatprep.subr.mxu0 0.0
  %v591 = vand.u32 %v504, 4294901760
  %v592 = vsub.f32 %v504, %v591
  %v593 = vand.u32 %v592, 4294901760
  %v594 = vsub.f32 %v592, %v593
  %v595 = vand.u32 %v594, 4294901760
  %596 = vmatpush1.xpose.msra.mxu0 %v595
  %597 = vmatprep.subr.mxu0 0.0
  %598 = vmatpush1.xpose.msra.mxu0 0.0
  %599 = vmatprep.subr.mxu0 0.0
  %600 = vmatpush1.xpose.msra.mxu0 0.0
  %601 = vmatprep.subr.mxu0 0.0
  %602 = vmatpush1.xpose.msra.mxu0 0.0
  %603 = vmatprep.subr.mxu0 0.0
  %604 = vmatpush1.xpose.msra.mxu0 0.0
  %605 = vmatprep.subr.mxu0 0.0
  %606 = vmatpush1.xpose.msra.mxu0 0.0
  %607 = vmatprep.subr.mxu0 0.0
  %608 = vmatpush1.xpose.msra.mxu0 0.0
  %609 = vmatprep.subr.mxu0 0.0
  %610 = vmatpush1.xpose.msra.mxu0 0.0
  %611 = vmatprep.subr.mxu0 0.0
  %612 = vmatpush1.xpose.msra.mxu0 0.0
  %613 = vmatprep.subr.mxu0 0.0
  %614 = vmatpush1.xpose.msra.mxu0 0.0
  %615 = vmatprep.subr.mxu0 0.0
  %616 = vmatpush1.xpose.msra.mxu0 0.0
  %617 = vmatprep.subr.mxu0 0.0
  %618 = vmatpush1.xpose.msra.mxu0 0.0
  %619 = vmatprep.subr.mxu0 0.0
  %620 = vmatpush1.xpose.msra.mxu0 0.0
  %621 = vmatprep.subr.mxu0 0.0
  %622 = vmatpush1.xpose.msra.mxu0 0.0
  %623 = vmatprep.subr.mxu0 0.0
  %624 = vmatpush1.xpose.msra.mxu0 0.0
  %625 = vmatprep.subr.mxu0 0.0
  %626 = vmatpush1.xpose.msra.mxu0 0.0
  %627 = vmatprep.subr.mxu0 0.0
  %628 = vmatpush1.xpose.msra.mxu0 0.0
  %629 = vmatprep.subr.mxu0 0.0
  %630 = vmatpush1.xpose.msra.mxu0 0.0
  %631 = vmatprep.subr.mxu0 0.0
  %632 = vmatpush1.xpose.msra.mxu0 0.0
  %633 = vmatprep.subr.mxu0 0.0
  %634 = vmatpush1.xpose.msra.mxu0 0.0
  %635 = vmatprep.subr.mxu0 0.0
  %636 = vmatpush1.xpose.msra.mxu0 0.0
  %637 = vmatprep.subr.mxu0 0.0
  %638 = vmatpush1.xpose.msra.mxu0 0.0
  %639 = vmatprep.subr.mxu0 0.0
  %640 = vmatpush1.xpose.msra.mxu0 0.0
  %641 = vmatprep.subr.mxu0 0.0
  %642 = vmatpush1.xpose.msra.mxu0 0.0
  %643 = vmatprep.subr.mxu0 0.0
  %644 = vmatpush1.xpose.msra.mxu0 0.0
  %645 = vmatprep.subr.mxu0 0.0
  %646 = vmatpush1.xpose.msra.mxu0 0.0
  %647 = vmatprep.subr.mxu0 0.0
  %648 = vmatpush1.xpose.msra.mxu0 0.0
  %649 = vmatprep.subr.mxu0 0.0
  %650 = vmatpush1.xpose.msra.mxu0 0.0
  %651 = vmatprep.subr.mxu0 0.0
  %652 = vmatpush1.xpose.msra.mxu0 0.0
  %653 = vmatprep.subr.mxu0 0.0
  %654 = vmatpush1.xpose.msra.mxu0 0.0
  %655 = vmatprep.subr.mxu0 0.0
  %656 = vmatpush1.xpose.msra.mxu0 0.0
  %657 = vmatprep.mubr.f32.mxu0 0.0
  %v658 = vand.u32 %v30, 4294901760
  %659 = vmatmul.mubr.f32.gmra.mrb[0].mxu0 %v658
  %v660 = vpop.f32.mrb[0].mxu0
  %v661 = vadd.f32 %v580, %v660
  %v662 = vpop.f32.mrb[0].mxu0
  %663 = vdwg.mxu0
  %664 = vmatprep.subr.mxu0 0.0
  %v665 = vand.u32 %v501, 4294901760
  %v666 = vsub.f32 %v501, %v665
  %667 = vmatpush1.xpose.msra.mxu0 %v666
  %668 = vmatprep.subr.mxu0 0.0
  %v669 = vand.u32 %v504, 4294901760
  %v670 = vsub.f32 %v504, %v669
  %671 = vmatpush1.xpose.msra.mxu0 %v670
  %672 = vmatprep.subr.mxu0 0.0
  %673 = vmatpush1.xpose.msra.mxu0 0.0
  %674 = vmatprep.subr.mxu0 0.0
  %675 = vmatpush1.xpose.msra.mxu0 0.0
  %676 = vmatprep.subr.mxu0 0.0
  %677 = vmatpush1.xpose.msra.mxu0 0.0
  %678 = vmatprep.subr.mxu0 0.0
  %679 = vmatpush1.xpose.msra.mxu0 0.0
  %680 = vmatprep.subr.mxu0 0.0
  %681 = vmatpush1.xpose.msra.mxu0 0.0
  %682 = vmatprep.subr.mxu0 0.0
  %683 = vmatpush1.xpose.msra.mxu0 0.0
  %684 = vmatprep.subr.mxu0 0.0
  %685 = vmatpush1.xpose.msra.mxu0 0.0
  %686 = vmatprep.subr.mxu0 0.0
  %687 = vmatpush1.xpose.msra.mxu0 0.0
  %688 = vmatprep.subr.mxu0 0.0
  %689 = vmatpush1.xpose.msra.mxu0 0.0
  %690 = vmatprep.subr.mxu0 0.0
  %691 = vmatpush1.xpose.msra.mxu0 0.0
  %692 = vmatprep.subr.mxu0 0.0
  %693 = vmatpush1.xpose.msra.mxu0 0.0
  %694 = vmatprep.subr.mxu0 0.0
  %695 = vmatpush1.xpose.msra.mxu0 0.0
  %696 = vmatprep.subr.mxu0 0.0
  %697 = vmatpush1.xpose.msra.mxu0 0.0
  %698 = vmatprep.subr.mxu0 0.0
  %699 = vmatpush1.xpose.msra.mxu0 0.0
  %700 = vmatprep.subr.mxu0 0.0
  %701 = vmatpush1.xpose.msra.mxu0 0.0
  %702 = vmatprep.subr.mxu0 0.0
  %703 = vmatpush1.xpose.msra.mxu0 0.0
  %704 = vmatprep.subr.mxu0 0.0
  %705 = vmatpush1.xpose.msra.mxu0 0.0
  %706 = vmatprep.subr.mxu0 0.0
  %707 = vmatpush1.xpose.msra.mxu0 0.0
  %708 = vmatprep.subr.mxu0 0.0
  %709 = vmatpush1.xpose.msra.mxu0 0.0
  %710 = vmatprep.subr.mxu0 0.0
  %711 = vmatpush1.xpose.msra.mxu0 0.0
  %712 = vmatprep.subr.mxu0 0.0
  %713 = vmatpush1.xpose.msra.mxu0 0.0
  %714 = vmatprep.subr.mxu0 0.0
  %715 = vmatpush1.xpose.msra.mxu0 0.0
  %716 = vmatprep.subr.mxu0 0.0
  %717 = vmatpush1.xpose.msra.mxu0 0.0
  %718 = vmatprep.subr.mxu0 0.0
  %719 = vmatpush1.xpose.msra.mxu0 0.0
  %720 = vmatprep.subr.mxu0 0.0
  %721 = vmatpush1.xpose.msra.mxu0 0.0
  %722 = vmatprep.subr.mxu0 0.0
  %723 = vmatpush1.xpose.msra.mxu0 0.0
  %724 = vmatprep.subr.mxu0 0.0
  %725 = vmatpush1.xpose.msra.mxu0 0.0
  %726 = vmatprep.subr.mxu0 0.0
  %727 = vmatpush1.xpose.msra.mxu0 0.0
  %728 = vmatprep.subr.mxu0 0.0
  %729 = vmatpush1.xpose.msra.mxu0 0.0
  %730 = vmatprep.subr.mxu0 0.0
  %731 = vmatpush1.xpose.msra.mxu0 0.0
  %732 = vmatprep.mubr.f32.mxu0 0.0
  %v733 = vand.u32 %v30, 4294901760
  %v734 = vsub.f32 %v30, %v733
  %735 = vmatmul.mubr.f32.gmra.mrb[0].mxu0 %v734
  %v736 = vpop.f32.mrb[0].mxu0
  %v737 = vadd.f32 %v661, %v736
  %v738 = vpop.f32.mrb[0].mxu0
  %739 = vdwg.mxu0
  %740 = vmatprep.subr.mxu0 0.0
  %v741 = vand.u32 %v501, 4294901760
  %742 = vmatpush1.xpose.msra.mxu0 %v741
  %743 = vmatprep.subr.mxu0 0.0
  %v744 = vand.u32 %v504, 4294901760
  %745 = vmatpush1.xpose.msra.mxu0 %v744
  %746 = vmatprep.subr.mxu0 0.0
  %747 = vmatpush1.xpose.msra.mxu0 0.0
  %748 = vmatprep.subr.mxu0 0.0
  %749 = vmatpush1.xpose.msra.mxu0 0.0
  %750 = vmatprep.subr.mxu0 0.0
  %751 = vmatpush1.xpose.msra.mxu0 0.0
  %752 = vmatprep.subr.mxu0 0.0
  %753 = vmatpush1.xpose.msra.mxu0 0.0
  %754 = vmatprep.subr.mxu0 0.0
  %755 = vmatpush1.xpose.msra.mxu0 0.0
  %756 = vmatprep.subr.mxu0 0.0
  %757 = vmatpush1.xpose.msra.mxu0 0.0
  %758 = vmatprep.subr.mxu0 0.0
  %759 = vmatpush1.xpose.msra.mxu0 0.0
  %760 = vmatprep.subr.mxu0 0.0
  %761 = vmatpush1.xpose.msra.mxu0 0.0
  %762 = vmatprep.subr.mxu0 0.0
  %763 = vmatpush1.xpose.msra.mxu0 0.0
  %764 = vmatprep.subr.mxu0 0.0
  %765 = vmatpush1.xpose.msra.mxu0 0.0
  %766 = vmatprep.subr.mxu0 0.0
  %767 = vmatpush1.xpose.msra.mxu0 0.0
  %768 = vmatprep.subr.mxu0 0.0
  %769 = vmatpush1.xpose.msra.mxu0 0.0
  %770 = vmatprep.subr.mxu0 0.0
  %771 = vmatpush1.xpose.msra.mxu0 0.0
  %772 = vmatprep.subr.mxu0 0.0
  %773 = vmatpush1.xpose.msra.mxu0 0.0
  %774 = vmatprep.subr.mxu0 0.0
  %775 = vmatpush1.xpose.msra.mxu0 0.0
  %776 = vmatprep.subr.mxu0 0.0
  %777 = vmatpush1.xpose.msra.mxu0 0.0
  %778 = vmatprep.subr.mxu0 0.0
  %779 = vmatpush1.xpose.msra.mxu0 0.0
  %780 = vmatprep.subr.mxu0 0.0
  %781 = vmatpush1.xpose.msra.mxu0 0.0
  %782 = vmatprep.subr.mxu0 0.0
  %783 = vmatpush1.xpose.msra.mxu0 0.0
  %784 = vmatprep.subr.mxu0 0.0
  %785 = vmatpush1.xpose.msra.mxu0 0.0
  %786 = vmatprep.subr.mxu0 0.0
  %787 = vmatpush1.xpose.msra.mxu0 0.0
  %788 = vmatprep.subr.mxu0 0.0
  %789 = vmatpush1.xpose.msra.mxu0 0.0
  %790 = vmatprep.subr.mxu0 0.0
  %791 = vmatpush1.xpose.msra.mxu0 0.0
  %792 = vmatprep.subr.mxu0 0.0
  %793 = vmatpush1.xpose.msra.mxu0 0.0
  %794 = vmatprep.subr.mxu0 0.0
  %795 = vmatpush1.xpose.msra.mxu0 0.0
  %796 = vmatprep.subr.mxu0 0.0
  %797 = vmatpush1.xpose.msra.mxu0 0.0
  %798 = vmatprep.subr.mxu0 0.0
  %799 = vmatpush1.xpose.msra.mxu0 0.0
  %800 = vmatprep.subr.mxu0 0.0
  %801 = vmatpush1.xpose.msra.mxu0 0.0
  %802 = vmatprep.subr.mxu0 0.0
  %803 = vmatpush1.xpose.msra.mxu0 0.0
  %804 = vmatprep.subr.mxu0 0.0
  %805 = vmatpush1.xpose.msra.mxu0 0.0
  %806 = vmatprep.mubr.f32.mxu0 0.0
  %v807 = vand.u32 %v30, 4294901760
  %v808 = vsub.f32 %v30, %v807
  %v809 = vand.u32 %v808, 4294901760
  %810 = vmatmul.mubr.f32.gmra.mrb[0].mxu0 %v809
  %v811 = vpop.f32.mrb[0].mxu0
  %v812 = vadd.f32 %v737, %v811
  %v813 = vpop.f32.mrb[0].mxu0
  %814 = vdwg.mxu0
  %815 = vmatprep.subr.mxu0 0.0
  %v816 = vand.u32 %v501, 4294901760
  %v817 = vsub.f32 %v501, %v816
  %v818 = vand.u32 %v817, 4294901760
  %819 = vmatpush1.xpose.msra.mxu0 %v818
  %820 = vmatprep.subr.mxu0 0.0
  %v821 = vand.u32 %v504, 4294901760
  %v822 = vsub.f32 %v504, %v821
  %v823 = vand.u32 %v822, 4294901760
  %824 = vmatpush1.xpose.msra.mxu0 %v823
  %825 = vmatprep.subr.mxu0 0.0
  %826 = vmatpush1.xpose.msra.mxu0 0.0
  %827 = vmatprep.subr.mxu0 0.0
  %828 = vmatpush1.xpose.msra.mxu0 0.0
  %829 = vmatprep.subr.mxu0 0.0
  %830 = vmatpush1.xpose.msra.mxu0 0.0
  %831 = vmatprep.subr.mxu0 0.0
  %832 = vmatpush1.xpose.msra.mxu0 0.0
  %833 = vmatprep.subr.mxu0 0.0
  %834 = vmatpush1.xpose.msra.mxu0 0.0
  %835 = vmatprep.subr.mxu0 0.0
  %836 = vmatpush1.xpose.msra.mxu0 0.0
  %837 = vmatprep.subr.mxu0 0.0
  %838 = vmatpush1.xpose.msra.mxu0 0.0
  %839 = vmatprep.subr.mxu0 0.0
  %840 = vmatpush1.xpose.msra.mxu0 0.0
  %841 = vmatprep.subr.mxu0 0.0
  %842 = vmatpush1.xpose.msra.mxu0 0.0
  %843 = vmatprep.subr.mxu0 0.0
  %844 = vmatpush1.xpose.msra.mxu0 0.0
  %845 = vmatprep.subr.mxu0 0.0
  %846 = vmatpush1.xpose.msra.mxu0 0.0
  %847 = vmatprep.subr.mxu0 0.0
  %848 = vmatpush1.xpose.msra.mxu0 0.0
  %849 = vmatprep.subr.mxu0 0.0
  %850 = vmatpush1.xpose.msra.mxu0 0.0
  %851 = vmatprep.subr.mxu0 0.0
  %852 = vmatpush1.xpose.msra.mxu0 0.0
  %853 = vmatprep.subr.mxu0 0.0
  %854 = vmatpush1.xpose.msra.mxu0 0.0
  %855 = vmatprep.subr.mxu0 0.0
  %856 = vmatpush1.xpose.msra.mxu0 0.0
  %857 = vmatprep.subr.mxu0 0.0
  %858 = vmatpush1.xpose.msra.mxu0 0.0
  %859 = vmatprep.subr.mxu0 0.0
  %860 = vmatpush1.xpose.msra.mxu0 0.0
  %861 = vmatprep.subr.mxu0 0.0
  %862 = vmatpush1.xpose.msra.mxu0 0.0
  %863 = vmatprep.subr.mxu0 0.0
  %864 = vmatpush1.xpose.msra.mxu0 0.0
  %865 = vmatprep.subr.mxu0 0.0
  %866 = vmatpush1.xpose.msra.mxu0 0.0
  %867 = vmatprep.subr.mxu0 0.0
  %868 = vmatpush1.xpose.msra.mxu0 0.0
  %869 = vmatprep.subr.mxu0 0.0
  %870 = vmatpush1.xpose.msra.mxu0 0.0
  %871 = vmatprep.subr.mxu0 0.0
  %872 = vmatpush1.xpose.msra.mxu0 0.0
  %873 = vmatprep.subr.mxu0 0.0
  %874 = vmatpush1.xpose.msra.mxu0 0.0
  %875 = vmatprep.subr.mxu0 0.0
  %876 = vmatpush1.xpose.msra.mxu0 0.0
  %877 = vmatprep.subr.mxu0 0.0
  %878 = vmatpush1.xpose.msra.mxu0 0.0
  %879 = vmatprep.subr.mxu0 0.0
  %880 = vmatpush1.xpose.msra.mxu0 0.0
  %881 = vmatprep.subr.mxu0 0.0
  %882 = vmatpush1.xpose.msra.mxu0 0.0
  %883 = vmatprep.subr.mxu0 0.0
  %884 = vmatpush1.xpose.msra.mxu0 0.0
  %885 = vmatprep.mubr.f32.mxu0 0.0
  %v886 = vand.u32 %v30, 4294901760
  %887 = vmatmul.mubr.f32.gmra.mrb[0].mxu0 %v886
  %v888 = vpop.f32.mrb[0].mxu0
  %v889 = vadd.f32 %v812, %v888
  %v890 = vpop.f32.mrb[0].mxu0
  %891 = vdwg.mxu0
  %892 = vmatprep.subr.mxu0 0.0
  %v893 = vand.u32 %v501, 4294901760
  %894 = vmatpush1.xpose.msra.mxu0 %v893
  %895 = vmatprep.subr.mxu0 0.0
  %v896 = vand.u32 %v504, 4294901760
  %897 = vmatpush1.xpose.msra.mxu0 %v896
  %898 = vmatprep.subr.mxu0 0.0
  %899 = vmatpush1.xpose.msra.mxu0 0.0
  %900 = vmatprep.subr.mxu0 0.0
  %901 = vmatpush1.xpose.msra.mxu0 0.0
  %902 = vmatprep.subr.mxu0 0.0
  %903 = vmatpush1.xpose.msra.mxu0 0.0
  %904 = vmatprep.subr.mxu0 0.0
  %905 = vmatpush1.xpose.msra.mxu0 0.0
  %906 = vmatprep.subr.mxu0 0.0
  %907 = vmatpush1.xpose.msra.mxu0 0.0
  %908 = vmatprep.subr.mxu0 0.0
  %909 = vmatpush1.xpose.msra.mxu0 0.0
  %910 = vmatprep.subr.mxu0 0.0
  %911 = vmatpush1.xpose.msra.mxu0 0.0
  %912 = vmatprep.subr.mxu0 0.0
  %913 = vmatpush1.xpose.msra.mxu0 0.0
  %914 = vmatprep.subr.mxu0 0.0
  %915 = vmatpush1.xpose.msra.mxu0 0.0
  %916 = vmatprep.subr.mxu0 0.0
  %917 = vmatpush1.xpose.msra.mxu0 0.0
  %918 = vmatprep.subr.mxu0 0.0
  %919 = vmatpush1.xpose.msra.mxu0 0.0
  %920 = vmatprep.subr.mxu0 0.0
  %921 = vmatpush1.xpose.msra.mxu0 0.0
  %922 = vmatprep.subr.mxu0 0.0
  %923 = vmatpush1.xpose.msra.mxu0 0.0
  %924 = vmatprep.subr.mxu0 0.0
  %925 = vmatpush1.xpose.msra.mxu0 0.0
  %926 = vmatprep.subr.mxu0 0.0
  %927 = vmatpush1.xpose.msra.mxu0 0.0
  %928 = vmatprep.subr.mxu0 0.0
  %929 = vmatpush1.xpose.msra.mxu0 0.0
  %930 = vmatprep.subr.mxu0 0.0
  %931 = vmatpush1.xpose.msra.mxu0 0.0
  %932 = vmatprep.subr.mxu0 0.0
  %933 = vmatpush1.xpose.msra.mxu0 0.0
  %934 = vmatprep.subr.mxu0 0.0
  %935 = vmatpush1.xpose.msra.mxu0 0.0
  %936 = vmatprep.subr.mxu0 0.0
  %937 = vmatpush1.xpose.msra.mxu0 0.0
  %938 = vmatprep.subr.mxu0 0.0
  %939 = vmatpush1.xpose.msra.mxu0 0.0
  %940 = vmatprep.subr.mxu0 0.0
  %941 = vmatpush1.xpose.msra.mxu0 0.0
  %942 = vmatprep.subr.mxu0 0.0
  %943 = vmatpush1.xpose.msra.mxu0 0.0
  %944 = vmatprep.subr.mxu0 0.0
  %945 = vmatpush1.xpose.msra.mxu0 0.0
  %946 = vmatprep.subr.mxu0 0.0
  %947 = vmatpush1.xpose.msra.mxu0 0.0
  %948 = vmatprep.subr.mxu0 0.0
  %949 = vmatpush1.xpose.msra.mxu0 0.0
  %950 = vmatprep.subr.mxu0 0.0
  %951 = vmatpush1.xpose.msra.mxu0 0.0
  %952 = vmatprep.subr.mxu0 0.0
  %953 = vmatpush1.xpose.msra.mxu0 0.0
  %954 = vmatprep.subr.mxu0 0.0
  %955 = vmatpush1.xpose.msra.mxu0 0.0
  %956 = vmatprep.subr.mxu0 0.0
  %957 = vmatpush1.xpose.msra.mxu0 0.0
  %958 = vmatprep.mubr.f32.mxu0 0.0
  %v959 = vand.u32 %v30, 4294901760
  %960 = vmatmul.mubr.f32.gmra.mrb[0].mxu0 %v959
  %v961 = vpop.f32.mrb[0].mxu0
  %v962 = vadd.f32 %v889, %v961
  %v963 = vpop.f32.mrb[0].mxu0
  %964 = vdwg.mxu0
  %v965 = vrsqrt.pop %v962
  %v966 = vmul.f32 %v962, %v965
  %vm967 = vcmp.eq.f32.partialorder %v962, inf
  %v968 = vsel %vm967, %v962, %v966
  %vm969 = vcmp.eq.f32.partialorder %v962, 0.0
  %v970 = vand.u32 %v962, 2147483648
  %v971 = vsel %vm969, %v970, %v968
  %v972 = vadd.f32 %v971, 1e-05
  %973 = vst.msk [vmem:[%s4 + $0x1] sm:$0x1] %vm497, %v972
  // Predicated region
  $region18: #{p_f_forward.1} parent=0 // pred_check
    _
  $region19: #{p_f_forward.1} parent=0 // pred_check_branch
    %975 = sbr.rel (0) target = $region21
  $region20: #{p_f_forward.1} parent=0 // pred_region
    _
  $region21: #{p_f_forward.1} parent=0 // pred_fallthru
    _
  // Predicated region
  $region22: #{p_f_forward.1} parent=0 // pred_check
    _
  $region23: #{p_f_forward.1} parent=0 // pred_check_branch
    %977 = sbr.rel (0) target = $region25
  $region24: #{p_f_forward.1} parent=0 // pred_region
    _
  $region25: #{p_f_forward.1} parent=0 // pred_fallthru
    _

</llo_original>
